<compile_context>
chip_gen: v5e
topology: v5e:2x2
jax: 0.10.0
libtpu: 0.0.40
codegen_flags: <defaults>
</compile_context>

<pallas_src>
import itertools

import numpy as np
import jax
import jax.numpy as jnp
from jax.experimental import pallas as pl
from jax.experimental.pallas import tpu as pltpu

NUM_CLASS = 18  # -> 19 logits per query (last = "no object")


def _round_up(x, m):
    return ((x + m - 1) // m) * m


def _vmem_spec():
    return pl.BlockSpec(memory_space=pltpu.MemorySpace.VMEM)


def _mm_nt(a, b):
    """(n, K) x (m, K) -> (n, m) contraction on last axes (no explicit transpose)."""
    return jax.lax.dot_general(a, b, (((1,), (1,)), ((), ())),
                               preferred_element_type=jnp.float32)


# --------------------------------------------------------------------------
# Kernel 1: batched combined matching-cost matrix
#           cost = w0 * cost_class + w1 * bce_cost + w2 * dice_cost
# --------------------------------------------------------------------------
def pallas_batched_costs(cost_class, pred_stack, tgt_stack, ns_dev, *,
                         tile_n, cost_w):
    """cost_class: (B, n_q, M_PAD) f32 (precomputed softmax gather),
    pred_stack: (B, n_q, N_pad) f32 mask logits,
    tgt_stack: (B, M_PAD, N_pad) f32 binary targets (0 in padding),
    ns_dev: (B,) int32 true superpoint counts.
    Returns the combined cost matrix (B, n_q, M_PAD)."""
    B, n_q, N_pad = pred_stack.shape
    M_PAD = tgt_stack.shape[1]
    assert N_pad % tile_n == 0
    num_nt = N_pad // tile_n
    w_cls, w_bce, w_dice = (float(cost_w[0]), float(cost_w[1]), float(cost_w[2]))

    def kernel(ns_ref, cls_ref, x_ref, t_ref, c_ref,
               acc_xt, acc_st, negrow, sigrow, tcol):
        b = pl.program_id(0)
        nt = pl.program_id(1)

        @pl.when(nt == 0)
        def _init():
            acc_xt[...] = jnp.zeros_like(acc_xt)
            acc_st[...] = jnp.zeros_like(acc_st)
            negrow[...] = jnp.zeros_like(negrow)
            sigrow[...] = jnp.zeros_like(sigrow)
            tcol[...] = jnp.zeros_like(tcol)

        x = x_ref[...]                       # (n_q, tile_n) mask logits
        t = t_ref[...]                       # (M_PAD, tile_n) binary targets
        n_true = ns_ref[b]

        # mask out padded superpoint columns for the row-sum terms
        col = nt * tile_n + jax.lax.broadcasted_iota(jnp.int32, x.shape, 1)
        cmask = (col < n_true).astype(jnp.float32)

        # shared exp(-|x|) for log-sigmoid and sigmoid (single EUP exp per elem)
        e = jnp.exp(-jnp.abs(x))
        stab = jnp.log(1.0 + e)              # log1p(e); e in (0,1] so exact enough
        neg = (jnp.maximum(x, 0.0) + stab) * cmask           # BCE(x, target=0)
        sig = (jnp.where(x >= 0.0, 1.0, e) / (1.0 + e)) * cmask

        # Only 2 big MXU matmuls: (pos-neg) == -x, so bce = rowsum(neg) - x@t.T
        acc_xt[...] += _mm_nt(x, t)                           # (n_q, M_PAD)
        acc_st[...] += _mm_nt(sig, t)                         # (n_q, M_PAD)
        negrow[...] += jnp.sum(neg, axis=-1, keepdims=True)   # (n_q, 1)
        sigrow[...] += jnp.sum(sig, axis=-1, keepdims=True)   # (n_q, 1)
        # per-target column sums in lane layout via a tiny ones matmul
        tcol[...] += _mm_nt(jnp.ones((8, tile_n), jnp.float32), t)   # (8, M_PAD)

        @pl.when(nt == num_nt - 1)
        def _finalize():
            nf = n_true.astype(jnp.float32)
            bce = (negrow[...] - acc_xt[...]) / nf
            tsum = tcol[0:1, :]                                # (1, M_PAD)
            denom = sigrow[...] + tsum + 1.0                   # (n_q, M_PAD)
            dice = 1.0 - (2.0 * acc_st[...] + 1.0) / denom
            c_ref[...] = w_cls * cls_ref[...] + w_bce * bce + w_dice * dice

    grid_spec = pltpu.PrefetchScalarGridSpec(
        num_scalar_prefetch=1,
        grid=(B, num_nt),
        in_specs=[
            pl.BlockSpec((None, n_q, M_PAD), lambda b, nt, ns: (b, 0, 0)),
            pl.BlockSpec((None, n_q, tile_n), lambda b, nt, ns: (b, 0, nt)),
            pl.BlockSpec((None, M_PAD, tile_n), lambda b, nt, ns: (b, 0, nt)),
        ],
        out_specs=pl.BlockSpec((None, n_q, M_PAD), lambda b, nt, ns: (b, 0, 0)),
        scratch_shapes=[
            pltpu.VMEM((n_q, M_PAD), jnp.float32),
            pltpu.VMEM((n_q, M_PAD), jnp.float32),
            pltpu.VMEM((n_q, 1), jnp.float32),
            pltpu.VMEM((n_q, 1), jnp.float32),
            pltpu.VMEM((8, M_PAD), jnp.float32),
        ],
    )
    flops = int(4 * B * n_q * M_PAD * N_pad)
    bytes_accessed = int(4 * B * ((n_q + M_PAD) * N_pad + 2 * n_q * M_PAD))
    transcendentals = int(2 * B * n_q * N_pad)
    return pl.pallas_call(
        kernel,
        out_shape=jax.ShapeDtypeStruct((B, n_q, M_PAD), jnp.float32),
        grid_spec=grid_spec,
        compiler_params=pltpu.CompilerParams(
            dimension_semantics=("parallel", "arbitrary"),
            vmem_limit_bytes=32 * 1024 * 1024),
        cost_estimate=pl.CostEstimate(flops=flops,
                                      transcendentals=transcendentals,
                                      bytes_accessed=bytes_accessed),
    )(ns_dev, cost_class, pred_stack, tgt_stack)


# --------------------------------------------------------------------------
# Kernel 2: weighted cross entropy (num/den packed into a lane-dense row)
# --------------------------------------------------------------------------
def _ce_kernel(logits_ref, onehot_ref, w_ref, out_ref):
    x = logits_ref[...].astype(jnp.float32)   # (M, C)
    oh = onehot_ref[...].astype(jnp.float32)  # (M, C)
    w = w_ref[...].astype(jnp.float32)        # (1, C)
    mx = jnp.max(x, axis=-1, keepdims=True)
    lse = mx + jnp.log(jnp.sum(jnp.exp(x - mx), axis=-1, keepdims=True))
    tgt_logit = jnp.sum(oh * x, axis=-1, keepdims=True)
    row_w = jnp.sum(oh * w, axis=-1, keepdims=True)
    num = jnp.sum((lse - tgt_logit) * row_w, axis=0, keepdims=True)   # (1, 1)
    den = jnp.sum(row_w, axis=0, keepdims=True)                       # (1, 1)
    lane = jax.lax.broadcasted_iota(jnp.int32, (1, 128), 1)
    out_ref[...] = (jnp.where(lane == 0, num, 0.0)
                    + jnp.where(lane == 1, den, 0.0))


def pallas_weighted_ce(logits, onehot, class_weight_row):
    return pl.pallas_call(
        _ce_kernel,
        out_shape=jax.ShapeDtypeStruct((1, 128), jnp.float32),
        in_specs=[_vmem_spec(), _vmem_spec(), _vmem_spec()],
        out_specs=_vmem_spec(),
    )(logits, onehot, class_weight_row)


# --------------------------------------------------------------------------
# Kernel 3: batched matched-mask losses: BCE(sum), dice(sum), IoU-filtered MSE
# --------------------------------------------------------------------------
def pallas_batched_mask_losses(pm_all, tgt_all, ps_all, ks_dev, ns_dev, *, tile_n):
    """pm_all/tgt_all: (B, M_PAD, N_pad) f32; ps_all: (B, M_PAD, 1) f32;
    ks_dev: (B,) matched counts; ns_dev: (B,) true superpoint counts.
    Returns (B, 1, 128): lanes [0..3] = bce_sum, dice_sum, mse_sum, mse_cnt."""
    B, M_PAD, N_pad = pm_all.shape
    assert N_pad % tile_n == 0
    num_nt = N_pad // tile_n

    def kernel(ks_ref, ns_ref, x_ref, t_ref, s_ref, out_ref,
               a_bce, a_num, a_sig, a_t, a_int):
        b = pl.program_id(0)
        nt = pl.program_id(1)

        @pl.when(nt == 0)
        def _init():
            a_bce[...] = jnp.zeros_like(a_bce)
            a_num[...] = jnp.zeros_like(a_num)
            a_sig[...] = jnp.zeros_like(a_sig)
            a_t[...] = jnp.zeros_like(a_t)
            a_int[...] = jnp.zeros_like(a_int)

        x = x_ref[...]                        # (M_PAD, tile_n)
        t = t_ref[...]                        # (M_PAD, tile_n)
        n_true = ns_ref[b]
        col = nt * tile_n + jax.lax.broadcasted_iota(jnp.int32, x.shape, 1)
        cmask = (col < n_true).astype(jnp.float32)

        e = jnp.exp(-jnp.abs(x))
        stab = jnp.log(1.0 + e)
        bce_el = (jnp.maximum(x, 0.0) - x * t + stab) * cmask
        sig = (jnp.where(x >= 0.0, 1.0, e) / (1.0 + e)) * cmask

        a_bce[...] += jnp.sum(bce_el, axis=-1, keepdims=True)
        a_num[...] += jnp.sum(sig * t, axis=-1, keepdims=True)
        a_sig[...] += jnp.sum(sig, axis=-1, keepdims=True)
        a_t[...] += jnp.sum(t, axis=-1, keepdims=True)
        binz = jnp.where(sig >= 0.5, 1.0, 0.0)    # padded cols: sig==0 -> 0
        tb = jnp.where(t > 0.5, 1.0, 0.0)
        a_int[...] += jnp.sum(binz * tb, axis=-1, keepdims=True)

        @pl.when(nt == num_nt - 1)
        def _finalize():
            k = ks_ref[b]
            rows = jax.lax.broadcasted_iota(jnp.int32, a_bce.shape, 0)
            rmask = (rows < k).astype(jnp.float32)                     # (M_PAD, 1)
            bsum = jnp.sum(a_bce[...] * rmask, axis=0, keepdims=True)  # (1, 1)
            dice_row = 1.0 - (2.0 * a_num[...] + 1.0) / (a_sig[...] + a_t[...] + 1.0)
            dsum = jnp.sum(dice_row * rmask, axis=0, keepdims=True)
            iou = a_int[...] / (a_t[...] + a_sig[...] - a_int[...] + 1e-6)
            keep = jnp.where(iou > 0.5, 1.0, 0.0) * rmask
            s = s_ref[...]                                             # (M_PAD, 1)
            msum = jnp.sum(keep * (s - iou) ** 2, axis=0, keepdims=True)
            mcnt = jnp.sum(keep, axis=0, keepdims=True)
            lane = jax.lax.broadcasted_iota(jnp.int32, (1, 128), 1)
            out_ref[...] = (jnp.where(lane == 0, bsum, 0.0)
                            + jnp.where(lane == 1, dsum, 0.0)
                            + jnp.where(lane == 2, msum, 0.0)
                            + jnp.where(lane == 3, mcnt, 0.0))

    grid_spec = pltpu.PrefetchScalarGridSpec(
        num_scalar_prefetch=2,
        grid=(B, num_nt),
        in_specs=[
            pl.BlockSpec((None, M_PAD, tile_n), lambda b, nt, ks, ns: (b, 0, nt)),
            pl.BlockSpec((None, M_PAD, tile_n), lambda b, nt, ks, ns: (b, 0, nt)),
            pl.BlockSpec((None, M_PAD, 1), lambda b, nt, ks, ns: (b, 0, 0)),
        ],
        out_specs=pl.BlockSpec((None, 1, 128), lambda b, nt, ks, ns: (b, 0, 0)),
        scratch_shapes=[pltpu.VMEM((M_PAD, 1), jnp.float32)] * 5,
    )
    return pl.pallas_call(
        kernel,
        out_shape=jax.ShapeDtypeStruct((B, 1, 128), jnp.float32),
        grid_spec=grid_spec,
        compiler_params=pltpu.CompilerParams(
            dimension_semantics=("parallel", "arbitrary"),
            vmem_limit_bytes=32 * 1024 * 1024),
    )(ks_dev, ns_dev, pm_all, tgt_all, ps_all)


# --------------------------------------------------------------------------
# Pure-JAX references (for verification)
# --------------------------------------------------------------------------
def ref_cost_matrices(pred_mask, tgt_mask):
    x = pred_mask.astype(jnp.float32)
    t = tgt_mask.astype(jnp.float32)
    n = x.shape[1]
    stab = jnp.log1p(jnp.exp(-jnp.abs(x)))
    pos = jnp.maximum(-x, 0.0) + stab
    neg = jnp.maximum(x, 0.0) + stab
    bce = (pos @ t.T + neg @ (1.0 - t).T) / n
    sig = jax.nn.sigmoid(x)
    numer = 2.0 * sig @ t.T
    denom = sig.sum(-1, keepdims=True) + t.sum(-1)[None, :]
    dice = 1.0 - (numer + 1.0) / (denom + 1.0)
    return bce, dice


def ref_weighted_ce(logits, onehot, w_row):
    x = logits.astype(jnp.float32)
    lse = jax.scipy.special.logsumexp(x, axis=-1, keepdims=True)
    tgt_logit = jnp.sum(onehot * x, axis=-1, keepdims=True)
    row_w = jnp.sum(onehot * w_row, axis=-1, keepdims=True)
    num = jnp.sum((lse - tgt_logit) * row_w).reshape(1, 1)
    den = jnp.sum(row_w).reshape(1, 1)
    return num, den


def ref_mask_losses(pred_mask, tgt_mask, pred_score):
    x = pred_mask.astype(jnp.float32)
    t = tgt_mask.astype(jnp.float32)
    s = pred_score.astype(jnp.float32)
    bce = jnp.mean(jnp.maximum(x, 0.0) - x * t + jnp.log1p(jnp.exp(-jnp.abs(x))))
    sig = jax.nn.sigmoid(x)
    numer = 2.0 * jnp.sum(sig * t, axis=-1)
    denom = jnp.sum(sig, axis=-1) + jnp.sum(t, axis=-1)
    dice = jnp.mean(1.0 - (numer + 1.0) / (denom + 1.0))
    binarized = (sig >= 0.5).astype(jnp.float32)
    tb = (t > 0.5).astype(jnp.float32)
    inter = jnp.sum(binarized * tb, axis=-1)
    union = jnp.sum(tb, axis=-1) + jnp.sum(sig, axis=-1) - inter
    iou = inter / (union + 1e-6)
    keep = (iou > 0.5).astype(jnp.float32)
    mse_sum = jnp.sum(keep * (s[:, 0] - iou) ** 2)
    mse_cnt = jnp.sum(keep)
    return (bce.reshape(1, 1), dice.reshape(1, 1),
            mse_sum.reshape(1, 1), mse_cnt.reshape(1, 1))


# --------------------------------------------------------------------------
# Hungarian matching (host side, Jonker-Volgenant shortest augmenting path)
# --------------------------------------------------------------------------
# TODO(synk): scipy.optimize.linear_sum_assignment has no Pallas equivalent; it
#             is reproduced on host with an O(n^3) JV solver (no factorial blow-up).
def _hungarian_rows_leq_cols(cost):
    """cost: (n, m) with n <= m.  Returns, for every row, its assigned column."""
    cost = np.asarray(cost, dtype=np.float64)
    n, m = cost.shape
    INF = np.inf
    u = np.zeros(n + 1)
    v = np.zeros(m + 1)
    p = np.zeros(m + 1, dtype=np.int64)   # p[j]: 1-based row assigned to column j
    way = np.zeros(m + 1, dtype=np.int64)
    for i in range(1, n + 1):
        p[0] = i
        j0 = 0
        minv = np.full(m + 1, INF)
        used = np.zeros(m + 1, dtype=bool)
        while True:
            used[j0] = True
            i0 = p[j0]
            free = ~used
            free[0] = False
            cur = np.concatenate(([INF], cost[i0 - 1, :] - u[i0] - v[1:]))
            upd = free & (cur < minv)
            minv[upd] = cur[upd]
            way[upd] = j0
            cand = np.where(free, minv, INF)
            j1 = int(np.argmin(cand))
            delta = cand[j1]
            used_idx = np.where(used)[0]
            u[p[used_idx]] += delta
            v[used_idx] -= delta
            minv[free] -= delta
            j0 = j1
            if p[j0] == 0:
                break
        while j0 != 0:
            j1 = way[j0]
            p[j0] = p[j1]
            j0 = j1
    ans = np.zeros(n, dtype=np.int64)
    for j in range(1, m + 1):
        if p[j] != 0:
            ans[p[j] - 1] = j - 1
    return ans


def _linear_sum_assignment(C):
    C = np.asarray(C, dtype=np.float64)
    n_r, n_c = C.shape
    if n_r <= n_c:
        rows = np.arange(n_r, dtype=np.int64)
        cols = _hungarian_rows_leq_cols(C)
    else:
        cols = np.arange(n_c, dtype=np.int64)
        rows = _hungarian_rows_leq_cols(C.T)
    order = np.argsort(rows)
    return rows[order], cols[order]


# --------------------------------------------------------------------------
# Criterion.forward equivalent (Pallas path: batched kernels, minimal syncs)
# --------------------------------------------------------------------------
def _criterion_forward_pallas(pred_labels, pred_scores, pred_masks, insts,
                              class_weight, loss_weight, cost_weight, tile_n_max):
    B, n_q, C = pred_labels.shape

    # -- host metadata (single upfront fetch of tiny label arrays) --
    gt_labels_np = [np.asarray(jax.device_get(gl)).astype(np.int64).reshape(-1)
                    for gl, _ in insts]
    ms = np.array([g.shape[0] for g in gt_labels_np], dtype=np.int64)
    ns = np.array([int(pm.shape[1]) for pm in pred_masks], dtype=np.int32)
    max_m = max(int(ms.max()), 1)
    M_PAD = _round_up(max_m, 128)                       # lane-dense cost last dim
    tile_n = min(tile_n_max, _round_up(int(ns.max()), 128))
    N_pad = _round_up(int(ns.max()), tile_n)

    # -- pad & stack masks on device --
    pred_stack = jnp.stack([
        jnp.pad(pm.astype(jnp.float32), ((0, 0), (0, N_pad - pm.shape[1])))
        for pm in pred_masks])                          # (B, n_q, N_pad)
    tgt_rows = []
    for b in range(B):
        t = insts[b][1].astype(jnp.float32)
        if t.shape[0] == 0:
            tgt_rows.append(jnp.zeros((M_PAD, N_pad), jnp.float32))
        else:
            tgt_rows.append(jnp.pad(
                t, ((0, M_PAD - t.shape[0]), (0, N_pad - t.shape[1]))))
    tgt_stack = jnp.stack(tgt_rows)                     # (B, M_PAD, N_pad)
    ns_dev = jnp.asarray(ns, jnp.int32)

    # -- class cost via softmax gather (plain JAX; needs dynamic label idx) --
    labels_pad = np.zeros((B, M_PAD), dtype=np.int32)
    for b in range(B):
        labels_pad[b, :ms[b]] = gt_labels_np[b]
    probs = jax.nn.softmax(pred_labels.astype(jnp.float32), axis=-1)  # (B, n_q, C)
    cost_class = -jax.vmap(lambda p, idx: p[:, idx])(probs, jnp.asarray(labels_pad))

    # -- batched combined matching cost (one pallas_call for all B) --
    C_all = pallas_batched_costs(cost_class, pred_stack, tgt_stack, ns_dev,
                                 tile_n=tile_n, cost_w=cost_weight)
    C_host = np.asarray(jax.device_get(C_all))          # single sync for matching

    # -- Hungarian matching per batch element (host) --
    indices = []
    for b in range(B):
        m = int(ms[b])
        if m == 0:
            indices.append((np.zeros(0, np.int64), np.zeros(0, np.int64)))
            continue
        indices.append(_linear_sum_assignment(C_host[b, :, :m]))

    # -- class targets + index plumbing (host) --
    tgt_class = np.full((B, n_q), NUM_CLASS, dtype=np.int32)
    idx_q_pad = np.zeros((B, M_PAD), dtype=np.int32)
    idx_gt_pad = np.zeros((B, M_PAD), dtype=np.int32)
    ks = np.zeros((B,), dtype=np.int32)
    for b, (iq, ig) in enumerate(indices):
        k = len(iq)
        ks[b] = k
        if k == 0:
            continue
        tgt_class[b, iq] = gt_labels_np[b][ig]
        idx_q_pad[b, :k] = iq
        idx_gt_pad[b, :k] = ig

    # -- weighted cross entropy over all queries --
    logits = pred_labels.reshape(B * n_q, C).astype(jnp.float32)
    onehot = jax.nn.one_hot(jnp.asarray(tgt_class.reshape(-1)), C, dtype=jnp.float32)
    ce_out = pallas_weighted_ce(logits, onehot,
                                class_weight.reshape(1, C).astype(jnp.float32))
    class_loss = ce_out[0, 0] / ce_out[0, 1]

    # -- matched mask / score losses (one batched pallas_call) --
    iq_dev = jnp.asarray(idx_q_pad)
    ig_dev = jnp.asarray(idx_gt_pad)
    pm_all = jax.vmap(lambda m_, i_: m_[i_])(pred_stack, iq_dev)      # (B, M_PAD, N_pad)
    tg_all = jax.vmap(lambda m_, i_: m_[i_])(tgt_stack, ig_dev)       # (B, M_PAD, N_pad)
    ps_all = jax.vmap(lambda m_, i_: m_[i_])(
        pred_scores.astype(jnp.float32), iq_dev)                      # (B, M_PAD, 1)
    ks_dev = jnp.asarray(ks, jnp.int32)

    ml_out = pallas_batched_mask_losses(pm_all, tg_all, ps_all, ks_dev, ns_dev,
                                        tile_n=tile_n)
    sums = ml_out[:, 0, :]                               # (B, 128)
    kf = jnp.maximum(jnp.asarray(ks, jnp.float32), 1.0)
    nf = jnp.asarray(ns, jnp.float32)
    valid = jnp.asarray((ks > 0).astype(np.float32))
    bce_per_b = sums[:, 0] / (kf * nf) * valid
    dice_per_b = sums[:, 1] / kf * valid
    score_per_b = jnp.where(sums[:, 3] > 0,
                            sums[:, 2] / jnp.maximum(sums[:, 3], 1.0), 0.0) * valid

    mask_bce_loss = jnp.sum(bce_per_b) / B
    # NOTE: the original forward() does NOT divide mask_dice_loss by the batch
    # size (only get_layer_loss does); reproduced as-is.
    mask_dice_loss = jnp.sum(dice_per_b)
    score_loss = jnp.sum(score_per_b) / B

    loss = (loss_weight[0] * class_loss + loss_weight[1] * mask_bce_loss
            + loss_weight[2] * mask_dice_loss + loss_weight[3] * score_loss)

    # single host sync for the scalar log dict
    vals = np.asarray(jax.device_get(jnp.stack(
        [class_loss, score_loss, mask_bce_loss, mask_dice_loss, loss])))
    loss_out = {
        'cls_loss': float(vals[0]),
        'score_loss': float(vals[1]),
        'mask_bce_loss': float(vals[2]),
        'mask_dice_loss': float(vals[3]),
        'loss': float(vals[4]),
    }
    return loss, loss_out, indices


# --------------------------------------------------------------------------
# Pure-JAX reference path (per-batch loops; for verification only)
# --------------------------------------------------------------------------
def _criterion_forward_reference(pred_labels, pred_scores, pred_masks, insts,
                                 class_weight, loss_weight, cost_weight):
    B, n_q, C = pred_labels.shape
    indices = []
    for b in range(B):
        gt_labels, gt_spmasks = insts[b]
        m = int(gt_labels.shape[0])
        if m == 0:
            indices.append((np.zeros(0, np.int64), np.zeros(0, np.int64)))
            continue
        cost_bce, cost_dice = ref_cost_matrices(pred_masks[b], gt_spmasks)
        probs = jax.nn.softmax(pred_labels[b].astype(jnp.float32), axis=-1)
        cost_class = -probs[:, gt_labels]
        Cmat = (cost_weight[0] * cost_class + cost_weight[1] * cost_bce
                + cost_weight[2] * cost_dice)
        indices.append(_linear_sum_assignment(np.asarray(jax.device_get(Cmat))))

    tgt_class = np.full((B, n_q), NUM_CLASS, dtype=np.int64)
    for b, (iq, ig) in enumerate(indices):
        if len(iq) == 0:
            continue
        gl = np.asarray(jax.device_get(insts[b][0]))
        tgt_class[b, iq] = gl[ig]

    logits = pred_labels.reshape(B * n_q, C).astype(jnp.float32)
    onehot = jax.nn.one_hot(jnp.asarray(tgt_class.reshape(-1)), C, dtype=jnp.float32)
    num, den = ref_weighted_ce(logits, onehot, class_weight.reshape(1, C))
    class_loss = num[0, 0] / den[0, 0]

    score_loss = jnp.float32(0.0)
    mask_bce_loss = jnp.float32(0.0)
    mask_dice_loss = jnp.float32(0.0)
    for b, (iq, ig) in enumerate(indices):
        if len(iq) == 0:
            continue
        _, gt_spmasks = insts[b]
        pm = pred_masks[b][jnp.asarray(iq)]
        tm = gt_spmasks[jnp.asarray(ig)].astype(jnp.float32)
        ps = pred_scores[b][jnp.asarray(iq)]
        bce, dice, ms_, mc_ = ref_mask_losses(pm, tm, ps)
        mask_bce_loss = mask_bce_loss + bce[0, 0]
        mask_dice_loss = mask_dice_loss + dice[0, 0]
        score_loss = score_loss + jnp.where(
            mc_[0, 0] > 0, ms_[0, 0] / jnp.maximum(mc_[0, 0], 1.0), 0.0)

    score_loss = score_loss / B
    mask_bce_loss = mask_bce_loss / B

    loss = (loss_weight[0] * class_loss + loss_weight[1] * mask_bce_loss
            + loss_weight[2] * mask_dice_loss + loss_weight[3] * score_loss)
    loss_out = {
        'cls_loss': float(class_loss),
        'score_loss': float(score_loss),
        'mask_bce_loss': float(mask_bce_loss),
        'mask_dice_loss': float(mask_dice_loss),
        'loss': float(loss),
    }
    return loss, loss_out, indices


def criterion_forward(pred_labels, pred_scores, pred_masks, insts,
                      class_weight, loss_weight, cost_weight,
                      use_pallas=True, tile_n_max=2048):
    # TODO(synk): aux_outputs / get_layer_loss not exercised here; the same
    #             batched kernels would simply be re-invoked per aux layer.
    if use_pallas:
        return _criterion_forward_pallas(pred_labels, pred_scores, pred_masks,
                                         insts, class_weight, loss_weight,
                                         cost_weight, tile_n_max)
    return _criterion_forward_reference(pred_labels, pred_scores, pred_masks,
                                        insts, class_weight, loss_weight,
                                        cost_weight)


# --------------------------------------------------------------------------
if __name__ == "__main__":
    # sanity-check the host Hungarian solver against brute force
    rng = np.random.RandomState(0)
    for shape in [(7, 4), (4, 7), (5, 5), (8, 3)]:
        Ct = rng.randn(*shape)
        r, c = _linear_sum_assignment(Ct)
        n_r, n_c = Ct.shape
        if n_r <= n_c:
            best = min(sum(Ct[i, perm[i]] for i in range(n_r))
                       for perm in itertools.permutations(range(n_c), n_r))
        else:
            best = min(sum(Ct[perm[j], j] for j in range(n_c))
                       for perm in itertools.permutations(range(n_r), n_c))
        assert abs(Ct[r, c].sum() - best) < 1e-9

    B, n_q = 3, 8
    C = NUM_CLASS + 1
    Ns = [150, 100, 120]          # ragged superpoint counts per scene

    key = jax.random.PRNGKey(0)
    kk = jax.random.split(key, 10)
    pred_labels = jax.random.normal(kk[0], (B, n_q, C), jnp.float32)
    pred_scores = jax.random.uniform(kk[1], (B, n_q, 1), jnp.float32)
    pred_masks = [jax.random.normal(kk[2 + b], (n_q, Ns[b]), jnp.float32)
                  for b in range(B)]

    # batch 0: 3 instances whose masks agree well with the first 3 query masks
    gt_labels0 = jax.random.randint(kk[5], (3,), 0, NUM_CLASS)
    gt_spmasks0 = (pred_masks[0][:3] > 0.0).astype(jnp.float32)
    # batch 1: 2 instances with random masks
    gt_labels1 = jax.random.randint(kk[6], (2,), 0, NUM_CLASS)
    gt_spmasks1 = (jax.random.uniform(kk[7], (2, Ns[1])) > 0.5).astype(jnp.float32)
    # batch 2: no instances (exercises the empty path)
    gt_labels2 = jnp.zeros((0,), jnp.int32)
    gt_spmasks2 = jnp.zeros((0, Ns[2]), jnp.float32)
    insts = [(gt_labels0, gt_spmasks0), (gt_labels1, gt_spmasks1),
             (gt_labels2, gt_spmasks2)]

    # Criterion buffers (deterministic, per __init__ defaults)
    class_weight = jnp.ones((C,), jnp.float32).at[-1].set(0.1)
    loss_weight = [1.0, 1.0, 1.0, 1.0]
    cost_weight = [1.0, 1.0, 1.0]

    # tile_n_max=128 on this tiny example forces a 2-step superpoint reduction
    # grid, exercising the tiled/accumulator path.
    loss_p, out_p, idx_p = criterion_forward(
        pred_labels, pred_scores, pred_masks, insts,
        class_weight, loss_weight, cost_weight, use_pallas=True, tile_n_max=128)
    jax.block_until_ready(loss_p)

    loss_r, out_r, idx_r = criterion_forward(
        pred_labels, pred_scores, pred_masks, insts,
        class_weight, loss_weight, cost_weight, use_pallas=False)
    jax.block_until_ready(loss_r)

    for (a_q, a_g), (b_q, b_g) in zip(idx_p, idx_r):
        assert np.array_equal(a_q, b_q) and np.array_equal(a_g, b_g)
    for k in ('cls_loss', 'score_loss', 'mask_bce_loss', 'mask_dice_loss', 'loss'):
        np.testing.assert_allclose(out_p[k], out_r[k], rtol=1e-4, atol=1e-5)

    print("KERNEL_OK")
</pallas_src>

<mosaic_0001>
module attributes {stable_mosaic.version = 11 : i64} {
  func.func @kernel(%arg0: i32, %arg1: i32, %arg2: memref<3xi32, #tpu.memory_space<smem>>, %arg3: memref<1x8x128xf32, #tpu.memory_space<vmem>>, %arg4: memref<1x8x128xf32, #tpu.memory_space<vmem>>, %arg5: memref<1x128x128xf32, #tpu.memory_space<vmem>>, %arg6: memref<1x8x128xf32, #tpu.memory_space<vmem>>, %arg7: memref<8x128xf32, #tpu.memory_space<vmem>>, %arg8: memref<8x128xf32, #tpu.memory_space<vmem>>, %arg9: memref<8x1xf32, #tpu.memory_space<vmem>>, %arg10: memref<8x1xf32, #tpu.memory_space<vmem>>, %arg11: memref<8x128xf32, #tpu.memory_space<vmem>>) attributes {dimension_semantics = [#tpu.dimension_semantics<parallel>, #tpu.dimension_semantics<arbitrary>], iteration_bounds = array<i64: 3, 2>, scalar_prefetch = 1 : i64, scratch_operands = 5 : i64, tpu.core_type = #tpu.core_type<tc>, window_params = [{transform_indices = @transform_0, window_bounds = array<i64: 1, 8, 128>}, {transform_indices = @transform_1, window_bounds = array<i64: 1, 8, 128>}, {transform_indices = @transform_2, window_bounds = array<i64: 1, 128, 128>}, {transform_indices = @transform_3, window_bounds = array<i64: 1, 8, 128>}]} {
    %c0_i32 = arith.constant 0 : i32
    %0 = arith.cmpi eq, %arg1, %c0_i32 : i32
    %1 = arith.extui %0 : i1 to i32
    %c0_i32_0 = arith.constant 0 : i32
    %2 = arith.cmpi ne, %1, %c0_i32_0 : i32
    scf.if %2 {
      %cst_38 = arith.constant 0.000000e+00 : f32
      %62 = vector.broadcast %cst_38 : f32 to vector<8x128xf32>
      %c0_39 = arith.constant 0 : index
      %c0_40 = arith.constant 0 : index
      %63 = vector.load %arg7[%c0_39, %c0_40] : memref<8x128xf32, #tpu.memory_space<vmem>>, vector<8x128xf32>
      tpu.vector_store %arg7[%c0_39, %c0_40], %62 {strides = array<i32>} : memref<8x128xf32, #tpu.memory_space<vmem>>, vector<8x128xf32>,
      %cst_41 = arith.constant 0.000000e+00 : f32
      %64 = vector.broadcast %cst_41 : f32 to vector<8x128xf32>
      %c0_42 = arith.constant 0 : index
      %c0_43 = arith.constant 0 : index
      %65 = vector.load %arg8[%c0_42, %c0_43] : memref<8x128xf32, #tpu.memory_space<vmem>>, vector<8x128xf32>
      tpu.vector_store %arg8[%c0_42, %c0_43], %64 {strides = array<i32>} : memref<8x128xf32, #tpu.memory_space<vmem>>, vector<8x128xf32>,
      %cst_44 = arith.constant 0.000000e+00 : f32
      %66 = vector.broadcast %cst_44 : f32 to vector<8x1xf32>
      %c0_45 = arith.constant 0 : index
      %c0_46 = arith.constant 0 : index
      %67 = vector.load %arg9[%c0_45, %c0_46] : memref<8x1xf32, #tpu.memory_space<vmem>>, vector<8x1xf32>
      tpu.vector_store %arg9[%c0_45, %c0_46], %66 {strides = array<i32>} : memref<8x1xf32, #tpu.memory_space<vmem>>, vector<8x1xf32>,
      %cst_47 = arith.constant 0.000000e+00 : f32
      %68 = vector.broadcast %cst_47 : f32 to vector<8x1xf32>
      %c0_48 = arith.constant 0 : index
      %c0_49 = arith.constant 0 : index
      %69 = vector.load %arg10[%c0_48, %c0_49] : memref<8x1xf32, #tpu.memory_space<vmem>>, vector<8x1xf32>
      tpu.vector_store %arg10[%c0_48, %c0_49], %68 {strides = array<i32>} : memref<8x1xf32, #tpu.memory_space<vmem>>, vector<8x1xf32>,
      %cst_50 = arith.constant 0.000000e+00 : f32
      %70 = vector.broadcast %cst_50 : f32 to vector<8x128xf32>
      %c0_51 = arith.constant 0 : index
      %c0_52 = arith.constant 0 : index
      %71 = vector.load %arg11[%c0_51, %c0_52] : memref<8x128xf32, #tpu.memory_space<vmem>>, vector<8x128xf32>
      tpu.vector_store %arg11[%c0_51, %c0_52], %70 {strides = array<i32>} : memref<8x128xf32, #tpu.memory_space<vmem>>, vector<8x128xf32>,
    } else {
    }
    %c0 = arith.constant 0 : index
    %c0_1 = arith.constant 0 : index
    %c0_2 = arith.constant 0 : index
    %3 = vector.load %arg4[%c0, %c0_1, %c0_2] : memref<1x8x128xf32, #tpu.memory_space<vmem>>, vector<1x8x128xf32>
    %4 = vector.shape_cast %3 : vector<1x8x128xf32> to vector<8x128xf32>
    %c0_3 = arith.constant 0 : index
    %c0_4 = arith.constant 0 : index
    %c0_5 = arith.constant 0 : index
    %5 = vector.load %arg5[%c0_3, %c0_4, %c0_5] : memref<1x128x128xf32, #tpu.memory_space<vmem>>, vector<1x128x128xf32>
    %6 = vector.shape_cast %5 : vector<1x128x128xf32> to vector<128x128xf32>
    %7 = arith.index_cast %arg0 : i32 to index
    %8 = memref.load %arg2[%7] : memref<3xi32, #tpu.memory_space<smem>>
    %c128_i32 = arith.constant 128 : i32
    %9 = arith.muli %arg1, %c128_i32 : i32
    %10 = tpu.iota {dimensions = array<i32: 1>} : vector<8x128xi32>
    %11 = vector.broadcast %9 : i32 to vector<8x128xi32>
    %12 = arith.addi %11, %10 : vector<8x128xi32>
    %13 = vector.broadcast %8 : i32 to vector<8x128xi32>
    %14 = arith.cmpi slt, %12, %13 : vector<8x128xi32>
    %15 = arith.extui %14 : vector<8x128xi1> to vector<8x128xi32>
    %16 = arith.sitofp %15 : vector<8x128xi32> to vector<8x128xf32>
    %17 = math.absf %4 : vector<8x128xf32>
    %cst = arith.constant 0.000000e+00 : f32
    %18 = vector.broadcast %cst : f32 to vector<8x128xf32>
    %19 = arith.subf %18, %17 : vector<8x128xf32>
    %20 = math.exp %19 : vector<8x128xf32>
    %cst_6 = arith.constant 1.000000e+00 : f32
    %21 = vector.broadcast %cst_6 : f32 to vector<8x128xf32>
    %22 = arith.addf %21, %20 : vector<8x128xf32>
    %23 = math.log %22 : vector<8x128xf32>
    %cst_7 = arith.constant 0.000000e+00 : f32
    %24 = vector.broadcast %cst_7 : f32 to vector<8x128xf32>
    %25 = arith.maximumf %4, %24 : vector<8x128xf32>
    %26 = arith.addf %25, %23 : vector<8x128xf32>
    %27 = arith.mulf %26, %16 : vector<8x128xf32>
    %cst_8 = arith.constant 0.000000e+00 : f32
    %28 = vector.broadcast %cst_8 : f32 to vector<8x128xf32>
    %29 = arith.cmpf oge, %4, %28 : vector<8x128xf32>
    %cst_9 = arith.constant 1.000000e+00 : f32
    %30 = vector.broadcast %cst_9 : f32 to vector<8x128xf32>
    %31 = arith.select %29, %30, %20 : vector<8x128xi1>, vector<8x128xf32>
    %cst_10 = arith.constant 1.000000e+00 : f32
    %32 = vector.broadcast %cst_10 : f32 to vector<8x128xf32>
    %33 = arith.addf %32, %20 : vector<8x128xf32>
    %34 = arith.divf %31, %33 : vector<8x128xf32>
    %35 = arith.mulf %34, %16 : vector<8x128xf32>
    %c0_11 = arith.constant 0 : index
    %c0_12 = arith.constant 0 : index
    %36 = vector.load %arg7[%c0_11, %c0_12] : memref<8x128xf32, #tpu.memory_space<vmem>>, vector<8x128xf32>
    %cst_13 = arith.constant dense<0.000000e+00> : vector<8x128xf32>
    %37 = tpu.matmul %4, %6, %cst_13 {dimension_numbers = #tpu.dot_dimension_numbers<[1], [1], [0], [0], [0, 0, 1, 0], [], []>} : vector<8x128xf32>, vector<128x128xf32>, vector<8x128xf32> -> vector<8x128xf32>
    %38 = arith.addf %36, %37 : vector<8x128xf32>
    %c0_14 = arith.constant 0 : index
    %c0_15 = arith.constant 0 : index
    %39 = vector.load %arg7[%c0_14, %c0_15] : memref<8x128xf32, #tpu.memory_space<vmem>>, vector<8x128xf32>
    tpu.vector_store %arg7[%c0_14, %c0_15], %38 {strides = array<i32>} : memref<8x128xf32, #tpu.memory_space<vmem>>, vector<8x128xf32>,
    %c0_16 = arith.constant 0 : index
    %c0_17 = arith.constant 0 : index
    %40 = vector.load %arg8[%c0_16, %c0_17] : memref<8x128xf32, #tpu.memory_space<vmem>>, vector<8x128xf32>
    %cst_18 = arith.constant dense<0.000000e+00> : vector<8x128xf32>
    %41 = tpu.matmul %35, %6, %cst_18 {dimension_numbers = #tpu.dot_dimension_numbers<[1], [1], [0], [0], [0, 0, 1, 0], [], []>} : vector<8x128xf32>, vector<128x128xf32>, vector<8x128xf32> -> vector<8x128xf32>
    %42 = arith.addf %40, %41 : vector<8x128xf32>
    %c0_19 = arith.constant 0 : index
    %c0_20 = arith.constant 0 : index
    %43 = vector.load %arg8[%c0_19, %c0_20] : memref<8x128xf32, #tpu.memory_space<vmem>>, vector<8x128xf32>
    tpu.vector_store %arg8[%c0_19, %c0_20], %42 {strides = array<i32>} : memref<8x128xf32, #tpu.memory_space<vmem>>, vector<8x128xf32>,
    %c0_21 = arith.constant 0 : index
    %c0_22 = arith.constant 0 : index
    %44 = vector.load %arg9[%c0_21, %c0_22] : memref<8x1xf32, #tpu.memory_space<vmem>>, vector<8x1xf32>
    %cst_23 = arith.constant dense<0.000000e+00> : vector<8xf32>
    %45 = vector.multi_reduction <add>, %27, %cst_23 [1] : vector<8x128xf32> to vector<8xf32>
    %46 = vector.shape_cast %45 : vector<8xf32> to vector<8x1xf32>
    %47 = arith.addf %44, %46 : vector<8x1xf32>
    %c0_24 = arith.constant 0 : index
    %c0_25 = arith.constant 0 : index
    %48 = vector.load %arg9[%c0_24, %c0_25] : memref<8x1xf32, #tpu.memory_space<vmem>>, vector<8x1xf32>
    tpu.vector_store %arg9[%c0_24, %c0_25], %47 {strides = array<i32>} : memref<8x1xf32, #tpu.memory_space<vmem>>, vector<8x1xf32>,
    %c0_26 = arith.constant 0 : index
    %c0_27 = arith.constant 0 : index
    %49 = vector.load %arg10[%c0_26, %c0_27] : memref<8x1xf32, #tpu.memory_space<vmem>>, vector<8x1xf32>
    %cst_28 = arith.constant dense<0.000000e+00> : vector<8xf32>
    %50 = vector.multi_reduction <add>, %35, %cst_28 [1] : vector<8x128xf32> to vector<8xf32>
    %51 = vector.shape_cast %50 : vector<8xf32> to vector<8x1xf32>
    %52 = arith.addf %49, %51 : vector<8x1xf32>
    %c0_29 = arith.constant 0 : index
    %c0_30 = arith.constant 0 : index
    %53 = vector.load %arg10[%c0_29, %c0_30] : memref<8x1xf32, #tpu.memory_space<vmem>>, vector<8x1xf32>
    tpu.vector_store %arg10[%c0_29, %c0_30], %52 {strides = array<i32>} : memref<8x1xf32, #tpu.memory_space<vmem>>, vector<8x1xf32>,
    %c0_31 = arith.constant 0 : index
    %c0_32 = arith.constant 0 : index
    %54 = vector.load %arg11[%c0_31, %c0_32] : memref<8x128xf32, #tpu.memory_space<vmem>>, vector<8x128xf32>
    %cst_33 = arith.constant 1.000000e+00 : f32
    %55 = vector.broadcast %cst_33 : f32 to vector<8x128xf32>
    %cst_34 = arith.constant dense<0.000000e+00> : vector<8x128xf32>
    %56 = tpu.matmul %55, %6, %cst_34 {dimension_numbers = #tpu.dot_dimension_numbers<[1], [1], [0], [0], [0, 0, 1, 0], [], []>} : vector<8x128xf32>, vector<128x128xf32>, vector<8x128xf32> -> vector<8x128xf32>
    %57 = arith.addf %54, %56 : vector<8x128xf32>
    %c0_35 = arith.constant 0 : index
    %c0_36 = arith.constant 0 : index
    %58 = vector.load %arg11[%c0_35, %c0_36] : memref<8x128xf32, #tpu.memory_space<vmem>>, vector<8x128xf32>
    tpu.vector_store %arg11[%c0_35, %c0_36], %57 {strides = array<i32>} : memref<8x128xf32, #tpu.memory_space<vmem>>, vector<8x128xf32>,
    %c1_i32 = arith.constant 1 : i32
    %59 = arith.cmpi eq, %arg1, %c1_i32 : i32
    %60 = arith.extui %59 : i1 to i32
    %c0_i32_37 = arith.constant 0 : i32
    %61 = arith.cmpi ne, %60, %c0_i32_37 : i32
    scf.if %61 {
      %62 = arith.sitofp %8 : i32 to f32
      %c0_38 = arith.constant 0 : index
      %c0_39 = arith.constant 0 : index
      %63 = vector.load %arg9[%c0_38, %c0_39] : memref<8x1xf32, #tpu.memory_space<vmem>>, vector<8x1xf32>
      %c0_40 = arith.constant 0 : index
      %c0_41 = arith.constant 0 : index
      %64 = vector.load %arg7[%c0_40, %c0_41] : memref<8x128xf32, #tpu.memory_space<vmem>>, vector<8x128xf32>
      %65 = vector.broadcast %63 : vector<8x1xf32> to vector<8x128xf32>
      %66 = arith.subf %65, %64 : vector<8x128xf32>
      %67 = vector.broadcast %62 : f32 to vector<8x128xf32>
      %68 = arith.divf %66, %67 : vector<8x128xf32>
      %c0_42 = arith.constant 0 : index
      %c0_43 = arith.constant 0 : index
      %69 = vector.load %arg11[%c0_42, %c0_43] : memref<8x128xf32, #tpu.memory_space<vmem>>, vector<1x128xf32>
      %c0_44 = arith.constant 0 : index
      %c0_45 = arith.constant 0 : index
      %70 = vector.load %arg10[%c0_44, %c0_45] : memref<8x1xf32, #tpu.memory_space<vmem>>, vector<8x1xf32>
      %71 = vector.broadcast %70 : vector<8x1xf32> to vector<8x128xf32>
      %72 = vector.broadcast %69 : vector<1x128xf32> to vector<8x128xf32>
      %73 = arith.addf %71, %72 : vector<8x128xf32>
      %cst_46 = arith.constant 1.000000e+00 : f32
      %74 = vector.broadcast %cst_46 : f32 to vector<8x128xf32>
      %75 = arith.addf %73, %74 : vector<8x128xf32>
      %c0_47 = arith.constant 0 : index
      %c0_48 = arith.constant 0 : index
      %76 = vector.load %arg8[%c0_47, %c0_48] : memref<8x128xf32, #tpu.memory_space<vmem>>, vector<8x128xf32>
      %cst_49 = arith.constant 2.000000e+00 : f32
      %77 = vector.broadcast %cst_49 : f32 to vector<8x128xf32>
      %78 = arith.mulf %77, %76 : vector<8x128xf32>
      %cst_50 = arith.constant 1.000000e+00 : f32
      %79 = vector.broadcast %cst_50 : f32 to vector<8x128xf32>
      %80 = arith.addf %78, %79 : vector<8x128xf32>
      %81 = arith.divf %80, %75 : vector<8x128xf32>
      %cst_51 = arith.constant 1.000000e+00 : f32
      %82 = vector.broadcast %cst_51 : f32 to vector<8x128xf32>
      %83 = arith.subf %82, %81 : vector<8x128xf32>
      %c0_52 = arith.constant 0 : index
      %c0_53 = arith.constant 0 : index
      %c0_54 = arith.constant 0 : index
      %84 = vector.load %arg3[%c0_52, %c0_53, %c0_54] : memref<1x8x128xf32, #tpu.memory_space<vmem>>, vector<1x8x128xf32>
      %85 = vector.shape_cast %84 : vector<1x8x128xf32> to vector<8x128xf32>
      %cst_55 = arith.constant 1.000000e+00 : f32
      %86 = vector.broadcast %cst_55 : f32 to vector<8x128xf32>
      %87 = arith.mulf %86, %85 : vector<8x128xf32>
      %cst_56 = arith.constant 1.000000e+00 : f32
      %88 = vector.broadcast %cst_56 : f32 to vector<8x128xf32>
      %89 = arith.mulf %88, %68 : vector<8x128xf32>
      %90 = arith.addf %87, %89 : vector<8x128xf32>
      %cst_57 = arith.constant 1.000000e+00 : f32
      %91 = vector.broadcast %cst_57 : f32 to vector<8x128xf32>
      %92 = arith.mulf %91, %83 : vector<8x128xf32>
      %93 = arith.addf %90, %92 : vector<8x128xf32>
      %c0_58 = arith.constant 0 : index
      %c0_59 = arith.constant 0 : index
      %c0_60 = arith.constant 0 : index
      %94 = vector.load %arg6[%c0_58, %c0_59, %c0_60] : memref<1x8x128xf32, #tpu.memory_space<vmem>>, vector<1x8x128xf32>
      %95 = vector.shape_cast %94 : vector<1x8x128xf32> to vector<8x128xf32>
      %96 = vector.shape_cast %93 : vector<8x128xf32> to vector<1x8x128xf32>
      tpu.vector_store %arg6[%c0_58, %c0_59, %c0_60], %96 {strides = array<i32>} : memref<1x8x128xf32, #tpu.memory_space<vmem>>, vector<1x8x128xf32>,
    } else {
    }
    return
  }
  func.func @transform_0(%arg0: i32, %arg1: i32, %arg2: memref<3xi32, #tpu.memory_space<smem>>) -> (i32, i32, i32) {
    %c0_i32 = arith.constant 0 : i32
    %c0_i32_0 = arith.constant 0 : i32
    %c0_i32_1 = arith.constant 0 : i32
    return %arg0, %c0_i32, %c0_i32_0 : i32, i32, i32
  }
  func.func @transform_1(%arg0: i32, %arg1: i32, %arg2: memref<3xi32, #tpu.memory_space<smem>>) -> (i32, i32, i32) {
    %c0_i32 = arith.constant 0 : i32
    %c0_i32_0 = arith.constant 0 : i32
    return %arg0, %c0_i32, %arg1 : i32, i32, i32
  }
  func.func @transform_2(%arg0: i32, %arg1: i32, %arg2: memref<3xi32, #tpu.memory_space<smem>>) -> (i32, i32, i32) {
    %c0_i32 = arith.constant 0 : i32
    %c0_i32_0 = arith.constant 0 : i32
    return %arg0, %c0_i32, %arg1 : i32, i32, i32
  }
  func.func @transform_3(%arg0: i32, %arg1: i32, %arg2: memref<3xi32, #tpu.memory_space<smem>>) -> (i32, i32, i32) {
    %c0_i32 = arith.constant 0 : i32
    %c0_i32_0 = arith.constant 0 : i32
    %c0_i32_1 = arith.constant 0 : i32
    return %arg0, %c0_i32, %c0_i32_0 : i32, i32, i32
  }
}

</mosaic_0001>

<llo_original>
// kernel: tpu_custom_call.1
$region0: #{tpu_custom_call.1}
  #allocation0 [shape = 'u32[]', space=smem, size = 0x4, offset = 0x4, fixed_abs, tag = 'smem constant byte address 0x4 - core index']
  #allocation1 [shape = 'u32[72,128]{1,0:T(1,128)}', space=vmem, size = 0x9000, scoped, tag = 'internal scratch']
  #allocation2 [shape = 'f32[8,128]{1,0:T(8,128)}', space=vmem, size = 0x1000, scoped, tag = 'scratch operand']
  #allocation3 [shape = 'f32[8,128]{1,0:T(8,128)}', space=vmem, size = 0x1000, scoped, tag = 'scratch operand']
  #allocation4 [shape = 'f32[8,1]{1,0:T(8,128)}', space=vmem, size = 0x1000, scoped, tag = 'scratch operand']
  #allocation5 [shape = 'f32[8,1]{1,0:T(8,128)}', space=vmem, size = 0x1000, scoped, tag = 'scratch operand']
  #allocation6 [shape = 'f32[8,128]{1,0:T(8,128)}', space=vmem, size = 0x1000, scoped, tag = 'scratch operand']
  #allocation7 [shape = 's32[1]{0}', space=sflag, size = 0x4, scoped, tag = 'scoped memory for tpu_custom_call.1']
  #allocation8 [shape = 'u8[512]{0}', space=smem, size = 0x200, scoped, tag = 'prefetched SMEM operand 0']
  %s0 = inlined_call_operand.hbm [shape: s32[3], index: 0, kind: input, shape index: {}]
  %s1 = inlined_call_operand.hbm [shape: f32[3,8,128], index: 1, kind: input, shape index: {}]
  %s2 = inlined_call_operand.hbm [shape: f32[3,8,256], index: 2, kind: input, shape index: {}]
  %s3 = inlined_call_operand.hbm [shape: f32[3,128,256], index: 3, kind: input, shape index: {}]
  %s4 = inlined_call_operand.hbm [shape: f32[3,8,128], index: 4, kind: output, shape index: {}]
  %s5 = sld [smem:[#allocation0]]
  $region65: #{tpu_custom_call.1} parent=0
    _
  %s7 = ssub.s32 1, %s5
  %s8 = scalar_select 0, %s7, %s5
  %s10 = sshll.u32 %s0, 4
  %s11 = int_to_ptr.hbm [resolvable:$true] %s10
  %13 = dma.hbm_to_smem %s11, 16, [#allocation8], [#allocation7]
  %15 = dma.done [#allocation7], 16
  %16 = sfence
  $region1: #{tpu_custom_call.1} parent=0
    #allocation9 [shape = 'u8[8192]{0}', space=vmem, size = 0x2000, scoped, tag = 'input window, operand 1']
    #allocation10 [shape = 's32[2]{0}', space=sflag, size = 0x8, scoped, tag = 'scoped memory for tpu_custom_call.1']
    #allocation11 [shape = 's32[2]{0}', space=sflag, size = 0x8, scoped, tag = 'scoped memory for tpu_custom_call.1']
    #allocation12 [shape = 'u8[8192]{0}', space=vmem, size = 0x2000, scoped, tag = 'input window, operand 2']
    #allocation13 [shape = 's32[2]{0}', space=sflag, size = 0x8, scoped, tag = 'scoped memory for tpu_custom_call.1']
    #allocation14 [shape = 'u8[131072]{0}', space=vmem, size = 0x20000, scoped, tag = 'input window, operand 3']
    #allocation15 [shape = 'u8[8192]{0}', space=vmem, size = 0x2000, scoped, tag = 'output window, operand 0']
    %17 = vsyncpa [#allocation10], 0
    %s18 = scalar_lea.sflag [#allocation10], 1
    %19 = vsyncpa %s18, 0
    %20 = vsyncpa [#allocation13], 0
    %s21 = scalar_lea.sflag [#allocation13], 1
    %22 = vsyncpa %s21, 0
    %23 = vsyncpa [#allocation11], 0
    %s24 = scalar_lea.sflag [#allocation11], 1
    %25 = vsyncpa %s24, 0
    loop: start=0, step=1, limit=8
    $region2: #{tpu_custom_call.1} parent=1 // loop_pre_header
      _
    $region3: #{tpu_custom_call.1} parent=1 // loop_header
      %s27 = sphi 0, %s31
      %p28 = scmp.ge.s32.totalorder %s27, 8
      %s34 = sphi 0, %s46
      %s35 = sphi 0, %s42
      %s36 = sphi 0, %s34
      %s37 = sphi 0, %s35
      %s38 = sphi 0, %s36
      %s39 = sphi 0, %s37
      %s49 = sphi 0, %s51
      %s52 = sphi 0, %s49
      %s53 = sphi 0, %s52
      %s69 = sphi 0, %s53
      %s77 = sphi 0, %s79
      %s80 = sphi 0, %s77
      %s81 = sphi 0, %s80
      %s97 = sphi 0, %s81
      %s105 = sphi 0, %s107
      %s108 = sphi 0, %s105
      %s109 = sphi 0, %s108
      %s125 = sphi 0, %s109
      %s131 = sphi 0, %s133
      %s134 = sphi 0, %s131
      %s135 = sphi 0, %s134
      %s151 = sphi 0, %s135
    $region4: #{tpu_custom_call.1} parent=1 // loop_header_branch
      %30 = sbr.rel (%p28) target = $region8
    $region5: #{tpu_custom_call.1} parent=1 // loop_body
      %s32 = ssub.s32 %s27, 1
      %s33 = ssub.s32 %s27, 2
      %s40 = sadd.s32 1, %s35
      %p41 = scmp.ge.s32.totalorder %s40, 2
      %s42 = scalar_select %p41, 0, %s40
      %s43 = sadd.s32 1, %s34
      %s44 = scalar_select %p41, %s43, %s34
      %p45 = scmp.ge.s32.totalorder %s44, 3
      %s46 = scalar_select %p45, 0, %s44
      %s47 = ssub.s32 %s34, %s46
      %p48 = scmp.eq.s32.totalorder %s47, 0
      %s50 = sadd.s32 %s49, 1
      %s51 = scalar_select %p48, %s49, %s50
      %p54 = pneg %p48
      %p55 = scmp.eq.s32.totalorder %s27, 5
      %p56 = por %p54, %p55
      %p57 = scmp.ne.s32.totalorder %s49, %s52
      %p58 = scmp.eq.s32.totalorder %s27, 0
      %p59 = por %p57, %p58
      %p60 = scmp.ne.s32.totalorder %s49, %s52
      %p61 = scmp.eq.s32.totalorder %s32, 5
      %p62 = por %p60, %p61
      %p63 = scmp.ne.s32.totalorder %s52, %s53
      %p64 = scmp.eq.s32.totalorder %s32, 0
      %p65 = por %p63, %p64
      %p66 = scmp.ne.s32.totalorder %s52, %s53
      %p67 = scmp.eq.s32.totalorder %s33, 5
      %p68 = por %p66, %p67
      %p70 = scmp.ne.s32.totalorder %s53, %s69
      %p71 = scmp.eq.s32.totalorder %s33, 0
      %p72 = por %p70, %p71
      %s73 = ssub.s32 %s34, %s46
      %s74 = ssub.s32 %s35, %s42
      %s75 = sor.u32 %s73, %s74
      %p76 = scmp.eq.s32.totalorder %s75, 0
      %s78 = sadd.s32 %s77, 1
      %s79 = scalar_select %p76, %s77, %s78
      %p82 = pneg %p76
      %p83 = scmp.eq.s32.totalorder %s27, 5
      %p84 = por %p82, %p83
      %p85 = scmp.ne.s32.totalorder %s77, %s80
      %p86 = scmp.eq.s32.totalorder %s27, 0
      %p87 = por %p85, %p86
      %p88 = scmp.ne.s32.totalorder %s77, %s80
      %p89 = scmp.eq.s32.totalorder %s32, 5
      %p90 = por %p88, %p89
      %p91 = scmp.ne.s32.totalorder %s80, %s81
      %p92 = scmp.eq.s32.totalorder %s32, 0
      %p93 = por %p91, %p92
      %p94 = scmp.ne.s32.totalorder %s80, %s81
      %p95 = scmp.eq.s32.totalorder %s33, 5
      %p96 = por %p94, %p95
      %p98 = scmp.ne.s32.totalorder %s81, %s97
      %p99 = scmp.eq.s32.totalorder %s33, 0
      %p100 = por %p98, %p99
      %s101 = ssub.s32 %s34, %s46
      %s102 = ssub.s32 %s35, %s42
      %s103 = sor.u32 %s101, %s102
      %p104 = scmp.eq.s32.totalorder %s103, 0
      %s106 = sadd.s32 %s105, 1
      %s107 = scalar_select %p104, %s105, %s106
      %p110 = pneg %p104
      %p111 = scmp.eq.s32.totalorder %s27, 5
      %p112 = por %p110, %p111
      %p113 = scmp.ne.s32.totalorder %s105, %s108
      %p114 = scmp.eq.s32.totalorder %s27, 0
      %p115 = por %p113, %p114
      %p116 = scmp.ne.s32.totalorder %s105, %s108
      %p117 = scmp.eq.s32.totalorder %s32, 5
      %p118 = por %p116, %p117
      %p119 = scmp.ne.s32.totalorder %s108, %s109
      %p120 = scmp.eq.s32.totalorder %s32, 0
      %p121 = por %p119, %p120
      %p122 = scmp.ne.s32.totalorder %s108, %s109
      %p123 = scmp.eq.s32.totalorder %s33, 5
      %p124 = por %p122, %p123
      %p126 = scmp.ne.s32.totalorder %s109, %s125
      %p127 = scmp.eq.s32.totalorder %s33, 0
      %p128 = por %p126, %p127
      %s129 = ssub.s32 %s34, %s46
      %p130 = scmp.eq.s32.totalorder %s129, 0
      %s132 = sadd.s32 %s131, 1
      %s133 = scalar_select %p130, %s131, %s132
      %p136 = pneg %p130
      %p137 = scmp.eq.s32.totalorder %s27, 5
      %p138 = por %p136, %p137
      %p139 = scmp.ne.s32.totalorder %s131, %s134
      %p140 = scmp.eq.s32.totalorder %s27, 0
      %p141 = por %p139, %p140
      %p142 = scmp.ne.s32.totalorder %s131, %s134
      %p143 = scmp.eq.s32.totalorder %s32, 5
      %p144 = por %p142, %p143
      %p145 = scmp.ne.s32.totalorder %s134, %s135
      %p146 = scmp.eq.s32.totalorder %s32, 0
      %p147 = por %p145, %p146
      %p148 = scmp.ne.s32.totalorder %s134, %s135
      %p149 = scmp.eq.s32.totalorder %s33, 5
      %p150 = por %p148, %p149
      %p152 = scmp.ne.s32.totalorder %s135, %s151
      %p153 = scmp.eq.s32.totalorder %s33, 0
      %p154 = por %p152, %p153
      %p155 = scmp.le.s32.totalorder 1, %s27
      %p156 = scmp.lt.s32.totalorder %s27, 7
      %p157 = pnand %p155, %p156
      %p158 = pneg %p157
      // Predicated region
      $region9: #{tpu_custom_call.1} parent=5 // pred_check
        _
      $region10: #{tpu_custom_call.1} parent=5 // pred_check_branch
        %160 = sbr.rel (%p157) target = $region12
      $region11: #{tpu_custom_call.1} parent=5 // pred_region
        %s161 = ssub.s32 %s27, 1
      $region12: #{tpu_custom_call.1} parent=5 // pred_fallthru
        _
      %p162 = scmp.lt.s32.totalorder %s27, 6
      // Predicated region
      $region13: #{tpu_custom_call.1} parent=5 // pred_check
        %p163 = pneg %p162
      $region14: #{tpu_custom_call.1} parent=5 // pred_check_branch
        %165 = sbr.rel (%p163) target = $region16
      $region15: #{tpu_custom_call.1} parent=5 // pred_region
        // Predicated region
        $region17: #{tpu_custom_call.1} parent=15 // pred_check
          %p166 = pneg %p59
        $region18: #{tpu_custom_call.1} parent=15 // pred_check_branch
          %168 = sbr.rel (%p166) target = $region20
        $region19: #{tpu_custom_call.1} parent=15 // pred_region
          %s169 = sand.u32 %s49, 1
          %s170 = scalar_lea.sflag [#allocation10], %s169
          %s171 = sand.u32 %s49, 1
          %s172 = smul.addr %s171, 8
          %s173 = scalar_lea.vmem [#allocation9], %s172
          %175 = vsyncadd %s170, 0
          %s176 = smul.addr %s34, 8
          %s177 = scalar_lea.hbm %s1, %s176
          %s179 = sshll.u32 %s177, 4
          %s180 = int_to_ptr.hbm [resolvable:$true] %s179
          %s181 = sshll.u32 %s173, 4
          %s182 = int_to_ptr.vmem [resolvable:$true] %s181
          %184 = dma.hbm_to_vmem [thread:$0]  %s180, 128, %s182, %s170
        $region20: #{tpu_custom_call.1} parent=15 // pred_fallthru
          _
        // Predicated region
        $region21: #{tpu_custom_call.1} parent=15 // pred_check
          %p185 = pneg %p87
        $region22: #{tpu_custom_call.1} parent=15 // pred_check_branch
          %187 = sbr.rel (%p185) target = $region24
        $region23: #{tpu_custom_call.1} parent=15 // pred_region
          %s188 = sand.u32 %s27, 1
          %s189 = scalar_lea.sflag [#allocation13], %s188
          %s190 = sand.u32 %s77, 1
          %s191 = smul.addr %s190, 8
          %s192 = scalar_lea.vmem [#allocation12], %s191
          %194 = vsyncadd %s189, 0
          %s195 = smul.addr %s34, 2
          %s196 = sadd.s32 %s35, %s195
          %s197 = smul.addr %s196, 8
          %s198 = scalar_lea.hbm %s2, %s197
          %s200 = sshll.u32 %s198, 4
          %s201 = int_to_ptr.hbm [resolvable:$true] %s200
          %s202 = sshll.u32 %s192, 4
          %s203 = int_to_ptr.vmem [resolvable:$true] %s202
          %205 = dma.hbm_to_vmem [thread:$0]  %s201, 128, %s203, %s189
        $region24: #{tpu_custom_call.1} parent=15 // pred_fallthru
          _
        // Predicated region
        $region25: #{tpu_custom_call.1} parent=15 // pred_check
          %p206 = pneg %p115
        $region26: #{tpu_custom_call.1} parent=15 // pred_check_branch
          %208 = sbr.rel (%p206) target = $region28
        $region27: #{tpu_custom_call.1} parent=15 // pred_region
          %s209 = sand.u32 %s27, 1
          %s210 = scalar_lea.sflag [#allocation13], %s209
          %s211 = sand.u32 %s105, 1
          %s212 = smul.addr %s211, 128
          %s213 = scalar_lea.vmem [#allocation14], %s212
          %215 = vsyncadd %s210, 0
          %s216 = smul.addr %s34, 32
          %s217 = sadd.s32 %s35, %s216
          %s218 = smul.addr %s217, 8
          %s219 = scalar_lea.hbm %s3, %s218
          %s220 = sshll.u32 %s219, 4
          %s221 = int_to_ptr.hbm [resolvable:$true] %s220
          %s222 = sshll.u32 %s213, 4
          %s223 = int_to_ptr.vmem [resolvable:$true] %s222
          %228 = dma.hbm_to_vmem [thread:$0]  %s221, 2048, %s223, %s210, 256, 128, 8
        $region28: #{tpu_custom_call.1} parent=15 // pred_fallthru
          _
      $region16: #{tpu_custom_call.1} parent=5 // pred_fallthru
        _
      %p229 = scmp.le.s32.totalorder 1, %s27
      %p230 = scmp.lt.s32.totalorder %s27, 7
      %p231 = pnand %p229, %p230
      %p232 = pneg %p231
      // Predicated region
      $region29: #{tpu_custom_call.1} parent=5 // pred_check
        _
      $region30: #{tpu_custom_call.1} parent=5 // pred_check_branch
        %234 = sbr.rel (%p231) target = $region32
      $region31: #{tpu_custom_call.1} parent=5 // pred_region
        %s235 = ssub.s32 %s27, 1
        %s236 = sand.u32 %s52, 1
        %s237 = scalar_lea.sflag [#allocation10], %s236
        %s238 = sand.u32 %s52, 1
        %s239 = smul.addr %s238, 8
        %s240 = scalar_lea.vmem [#allocation9], %s239
        // Predicated region
        $region33: #{tpu_custom_call.1} parent=31 // pred_check
          %p241 = pneg %p65
        $region34: #{tpu_custom_call.1} parent=31 // pred_check_branch
          %243 = sbr.rel (%p241) target = $region36
        $region35: #{tpu_custom_call.1} parent=31 // pred_region
          %245 = dma.done %s237, 128
        $region36: #{tpu_custom_call.1} parent=31 // pred_fallthru
          _
        %s246 = sand.u32 %s32, 1
        %s247 = scalar_lea.sflag [#allocation13], %s246
        %s248 = sand.u32 %s80, 1
        %s249 = smul.addr %s248, 8
        %s250 = scalar_lea.vmem [#allocation12], %s249
        // Predicated region
        $region37: #{tpu_custom_call.1} parent=31 // pred_check
          %p251 = pneg %p93
        $region38: #{tpu_custom_call.1} parent=31 // pred_check_branch
          %253 = sbr.rel (%p251) target = $region40
        $region39: #{tpu_custom_call.1} parent=31 // pred_region
          %255 = dma.done %s247, 128
        $region40: #{tpu_custom_call.1} parent=31 // pred_fallthru
          _
        %s256 = sand.u32 %s32, 1
        %s257 = scalar_lea.sflag [#allocation13], %s256
        %s258 = sand.u32 %s108, 1
        %s259 = smul.addr %s258, 128
        %s260 = scalar_lea.vmem [#allocation14], %s259
        // Predicated region
        $region41: #{tpu_custom_call.1} parent=31 // pred_check
          %p261 = pneg %p121
        $region42: #{tpu_custom_call.1} parent=31 // pred_check_branch
          %263 = sbr.rel (%p261) target = $region44
        $region43: #{tpu_custom_call.1} parent=31 // pred_region
          %265 = dma.done %s257, 2048
        $region44: #{tpu_custom_call.1} parent=31 // pred_fallthru
          _
        %s266 = sand.u32 %s52, 1
        %s267 = scalar_lea.sflag [#allocation10], %s266
        %s268 = sand.u32 %s52, 1
        %s269 = smul.addr %s268, 8
        %s270 = scalar_lea.vmem [#allocation9], %s269
        %p271 = pneg %p65
        %p272 = pneg %p62
        %s273 = sand.u32 %s32, 1
        %s274 = scalar_lea.sflag [#allocation13], %s273
        %s275 = sand.u32 %s80, 1
        %s276 = smul.addr %s275, 8
        %s277 = scalar_lea.vmem [#allocation12], %s276
        %p278 = pneg %p93
        %p279 = pneg %p90
        %s280 = sand.u32 %s32, 1
        %s281 = scalar_lea.sflag [#allocation13], %s280
        %s282 = sand.u32 %s108, 1
        %s283 = smul.addr %s282, 128
        %s284 = scalar_lea.vmem [#allocation14], %s283
        %p285 = pneg %p121
        %p286 = pneg %p118
        %p287 = pneg %p147
        %p288 = pneg %p144
        %s289 = sand.u32 %s134, 1
        %s290 = scalar_lea.sflag [#allocation11], %s289
        %s291 = sand.u32 %s134, 1
        %s292 = smul.addr %s291, 8
        %s293 = scalar_lea.vmem [#allocation15], %s292
        %p294 = scmp.eq.s32.totalorder %s37, 0
        // Predicated region
        $region45: #{tpu_custom_call.1} parent=31 // pred_check
          %p295 = pneg %p294
        $region46: #{tpu_custom_call.1} parent=31 // pred_check_branch
          %297 = sbr.rel (%p295) target = $region48
        $region47: #{tpu_custom_call.1} parent=31 // pred_region
          %298 = vst [vmem:[#allocation2] sm:$0xff] 0.0
          %299 = vst [vmem:[#allocation3] sm:$0xff] 0.0
          %vm300 = vcmask 7168
          %301 = vst.msk [vmem:[#allocation4] sm:$0xff] %vm300, 0.0
          %302 = vst.msk [vmem:[#allocation5] sm:$0xff] %vm300, 0.0
          %303 = vst [vmem:[#allocation6] sm:$0xff] 0.0
        $region48: #{tpu_custom_call.1} parent=31 // pred_fallthru
          _
        %v304 = vld [vmem:[%s250] sm:$0xff]
        %v305 = vld [vmem:[%s260] sm:$0xff]
        %v306 = vld [vmem:[%s260 + $0x8] sm:$0xff]
        %v307 = vld [vmem:[%s260 + $0x10] sm:$0xff]
        %v308 = vld [vmem:[%s260 + $0x18] sm:$0xff]
        %v309 = vld [vmem:[%s260 + $0x20] sm:$0xff]
        %v310 = vld [vmem:[%s260 + $0x28] sm:$0xff]
        %v311 = vld [vmem:[%s260 + $0x30] sm:$0xff]
        %v312 = vld [vmem:[%s260 + $0x38] sm:$0xff]
        %v313 = vld [vmem:[%s260 + $0x40] sm:$0xff]
        %v314 = vld [vmem:[%s260 + $0x48] sm:$0xff]
        %v315 = vld [vmem:[%s260 + $0x50] sm:$0xff]
        %v316 = vld [vmem:[%s260 + $0x58] sm:$0xff]
        %v317 = vld [vmem:[%s260 + $0x60] sm:$0xff]
        %v318 = vld [vmem:[%s260 + $0x68] sm:$0xff]
        %v319 = vld [vmem:[%s260 + $0x70] sm:$0xff]
        %v320 = vld [vmem:[%s260 + $0x78] sm:$0xff]
        %s321 = sld [smem:[#allocation8 + %s36]]
        %s322 = smul.u32 %s37, 128
        %v323 = vlaneseq
        %v324 = vand.u32 %v323, 127
        %v325 = vstv %s322
        %v326 = vadd.s32 %v325, %v324
        %v327 = vstv %s321
        %vm328 = vcmp.lt.s32.totalorder %v326, %v327
        %v329 = vsel %vm328, 1, 0
        %v330 = vcvt.s32.f32 %v329
        %v331 = vand.u32 2147483647, %v304
        %v332 = vsub.f32 0.0, %v331
        %v333 = vmul.f32 %v332, 1.442695
        %v334 = vpow.pop %v333
        %v335 = vadd.f32 %v334, 1.0
        %v336 = vlog2.pop %v335
        %v337 = vmul.f32 %v336, 0.6931472
        %v338 = vmax.f32 %v304, 0.0
        %v339 = vadd.f32 %v338, %v337
        %v340 = vmul.f32 %v339, %v330
        %vm341 = vcmp.ge.f32.partialorder %v304, 0.0
        %v342 = vsel %vm341, 1.0, %v334
        %v343 = vrcp.pop %v335
        %v344 = vmul.f32 %v335, %v343
        %v345 = vsub.f32 1.0, %v344
        %v346 = vmul.f32 %v343, %v345
        %v347 = vadd.f32 %v343, %v346
        %vm348 = vweird.f32 %v335
        %vm349 = vweird.f32 %v343
        %vm350 = vmor %vm348, %vm349
        %v351 = vsel %vm350, %v343, %v347
        %v352 = vand.u32 2147483647, %v335
        %vm353 = vcmp.eq.f32.partialorder %v352, 8.507059e+37
        %v354 = vand.u32 %v335, 2147483648
        %v355 = vor.u32 1.1754944e-38, %v354
        %v356 = vsel %vm353, %v355, %v351
        %v357 = vmul.f32 %v342, %v356
        %v358 = vmul.f32 %v357, %v330
        %v359 = vld [vmem:[#allocation2] sm:$0xff]
        %360 = vmatpush.xpose.msra.mxu0 %v320
        %361 = vmatpush.xpose.msra.mxu0 %v319
        %362 = vmatpush.xpose.msra.mxu0 %v318
        %363 = vmatpush.xpose.msra.mxu0 %v317
        %364 = vmatpush.xpose.msra.mxu0 %v316
        %365 = vmatpush.xpose.msra.mxu0 %v315
        %366 = vmatpush.xpose.msra.mxu0 %v314
        %367 = vmatpush.xpose.msra.mxu0 %v313
        %368 = vmatpush.xpose.msra.mxu0 %v312
        %369 = vmatpush.xpose.msra.mxu0 %v311
        %370 = vmatpush.xpose.msra.mxu0 %v310
        %371 = vmatpush.xpose.msra.mxu0 %v309
        %372 = vmatpush.xpose.msra.mxu0 %v308
        %373 = vmatpush.xpose.msra.mxu0 %v307
        %374 = vmatpush.xpose.msra.mxu0 %v306
        %375 = vmatpush.xpose.msra.mxu0 %v305
        %376 = vmatmul.f32.gmra.mxu0 %v304
        %v377 = vpop.f32.mrf.mxu0
        %v378 = vadd.f32 0.0, %v377
        %379 = vdwg.mxu0
        %v380 = vadd.f32 %v359, %v378
        %381 = vst [vmem:[#allocation2] sm:$0xff] %v380
        %v382 = vld [vmem:[#allocation3] sm:$0xff]
        %383 = vmatpush.xpose.msra.mxu0 %v320
        %384 = vmatpush.xpose.msra.mxu0 %v319
        %385 = vmatpush.xpose.msra.mxu0 %v318
        %386 = vmatpush.xpose.msra.mxu0 %v317
        %387 = vmatpush.xpose.msra.mxu0 %v316
        %388 = vmatpush.xpose.msra.mxu0 %v315
        %389 = vmatpush.xpose.msra.mxu0 %v314
        %390 = vmatpush.xpose.msra.mxu0 %v313
        %391 = vmatpush.xpose.msra.mxu0 %v312
        %392 = vmatpush.xpose.msra.mxu0 %v311
        %393 = vmatpush.xpose.msra.mxu0 %v310
        %394 = vmatpush.xpose.msra.mxu0 %v309
        %395 = vmatpush.xpose.msra.mxu0 %v308
        %396 = vmatpush.xpose.msra.mxu0 %v307
        %397 = vmatpush.xpose.msra.mxu0 %v306
        %398 = vmatpush.xpose.msra.mxu0 %v305
        %399 = vmatmul.f32.gmra.mxu0 %v358
        %v400 = vpop.f32.mrf.mxu0
        %v401 = vadd.f32 0.0, %v400
        %402 = vdwg.mxu0
        %v403 = vadd.f32 %v382, %v401
        %404 = vst [vmem:[#allocation3] sm:$0xff] %v403
        %v405 = vld [vmem:[#allocation4] sm:$0xff]
        %406 = vadd.xlane.f32.xlu0 %v340
        %v407 = vpop.xlane.xlu0 %406
        %v408 = vadd.f32 %v405, %v407
        %vm409 = vcmask 7168
        %410 = vst.msk [vmem:[#allocation4] sm:$0xff] %vm409, %v408
        %v411 = vld [vmem:[#allocation5] sm:$0xff]
        %412 = vadd.xlane.f32.xlu0 %v358
        %v413 = vpop.xlane.xlu0 %412
        %v414 = vadd.f32 %v411, %v413
        %415 = vst.msk [vmem:[#allocation5] sm:$0xff] %vm409, %v414
        %v416 = vld [vmem:[#allocation6] sm:$0xff]
        %417 = vmatpush.xpose.msra.mxu0 %v320
        %418 = vmatpush.xpose.msra.mxu0 %v319
        %419 = vmatpush.xpose.msra.mxu0 %v318
        %420 = vmatpush.xpose.msra.mxu0 %v317
        %421 = vmatpush.xpose.msra.mxu0 %v316
        %422 = vmatpush.xpose.msra.mxu0 %v315
        %423 = vmatpush.xpose.msra.mxu0 %v314
        %424 = vmatpush.xpose.msra.mxu0 %v313
        %425 = vmatpush.xpose.msra.mxu0 %v312
        %426 = vmatpush.xpose.msra.mxu0 %v311
        %427 = vmatpush.xpose.msra.mxu0 %v310
        %428 = vmatpush.xpose.msra.mxu0 %v309
        %429 = vmatpush.xpose.msra.mxu0 %v308
        %430 = vmatpush.xpose.msra.mxu0 %v307
        %431 = vmatpush.xpose.msra.mxu0 %v306
        %432 = vmatpush.xpose.msra.mxu0 %v305
        %433 = vmatmul.f32.gmra.mxu0 1.0
        %v434 = vpop.f32.mrf.mxu0
        %v435 = vadd.f32 0.0, %v434
        %436 = vdwg.mxu0
        %v437 = vadd.f32 %v416, %v435
        %438 = vst [vmem:[#allocation6] sm:$0xff] %v437
        %p439 = scmp.eq.s32.totalorder %s37, 1
        // Predicated region
        $region49: #{tpu_custom_call.1} parent=31 // pred_check
          %p440 = pneg %p439
        $region50: #{tpu_custom_call.1} parent=31 // pred_check_branch
          %442 = sbr.rel (%p440) target = $region52
        $region51: #{tpu_custom_call.1} parent=31 // pred_region
          %s443 = scvt.s32.f32 %s321
          %v444 = vld [vmem:[#allocation4] sm:$0xff]
          %v445 = vld [vmem:[#allocation2] sm:$0xff]
          %447 = vset.pattern.permute.xlu0 0
          %448 = vperm.xlu0 %447, %v444
          %v449 = vpop.permute.xlu0 %448
          %v451 = vsub.f32 %v449, %v445
          %v452 = vstv %s443
          %v453 = vrcp.pop %v452
          %v454 = vmul.f32 %v452, %v453
          %v455 = vsub.f32 1.0, %v454
          %v456 = vmul.f32 %v453, %v455
          %v457 = vadd.f32 %v453, %v456
          %vm458 = vweird.f32 %v452
          %vm459 = vweird.f32 %v453
          %vm460 = vmor %vm458, %vm459
          %v461 = vsel %vm460, %v453, %v457
          %v462 = vand.u32 2147483647, %v452
          %vm463 = vcmp.eq.f32.partialorder %v462, 8.507059e+37
          %v464 = vand.u32 %v452, 2147483648
          %v465 = vor.u32 1.1754944e-38, %v464
          %v466 = vsel %vm463, %v465, %v461
          %v467 = vmul.f32 %v451, %v466
          %v468 = vld [vmem:[#allocation6] sm:$0x1]
          %v469 = vld [vmem:[#allocation5] sm:$0xff]
          %471 = vset.pattern.permute.xlu0 0
          %472 = vperm.xlu0 %471, %v469
          %v473 = vpop.permute.xlu0 %472
          %v475 = vperm.slane %v468, 0
          %v476 = vadd.f32 %v473, %v475
          %v477 = vadd.f32 %v476, 1.0
          %v478 = vld [vmem:[#allocation3] sm:$0xff]
          %v479 = vmul.f32 %v478, 2.0
          %v480 = vadd.f32 %v479, 1.0
          %v481 = vrcp.pop %v477
          %v482 = vmul.f32 %v477, %v481
          %v483 = vsub.f32 1.0, %v482
          %v484 = vmul.f32 %v481, %v483
          %v485 = vadd.f32 %v481, %v484
          %vm486 = vweird.f32 %v477
          %vm487 = vweird.f32 %v481
          %vm488 = vmor %vm486, %vm487
          %v489 = vsel %vm488, %v481, %v485
          %v490 = vand.u32 2147483647, %v477
          %vm491 = vcmp.eq.f32.partialorder %v490, 8.507059e+37
          %v492 = vand.u32 %v477, 2147483648
          %v493 = vor.u32 1.1754944e-38, %v492
          %v494 = vsel %vm491, %v493, %v489
          %v495 = vmul.f32 %v480, %v494
          %v496 = vsub.f32 1.0, %v495
          %v497 = vld [vmem:[%s240] sm:$0xff]
          %v498 = vadd.f32 %v497, %v467
          %v499 = vadd.f32 %v498, %v496
          %500 = vst [vmem:[%s293] sm:$0xff] %v499
        $region52: #{tpu_custom_call.1} parent=31 // pred_fallthru
          _
        %s501 = sand.u32 %s134, 1
        %s502 = scalar_lea.sflag [#allocation11], %s501
        %s503 = sand.u32 %s134, 1
        %s504 = smul.addr %s503, 8
        %s505 = scalar_lea.vmem [#allocation15], %s504
        // Predicated region
        $region53: #{tpu_custom_call.1} parent=31 // pred_check
          %p506 = pneg %p144
        $region54: #{tpu_custom_call.1} parent=31 // pred_check_branch
          %508 = sbr.rel (%p506) target = $region56
        $region55: #{tpu_custom_call.1} parent=31 // pred_region
          %510 = vsyncadd %s502, 0
          %s511 = smul.addr %s36, 8
          %s512 = scalar_lea.hbm %s4, %s511
          %s514 = sshll.u32 %s505, 4
          %s515 = int_to_ptr.vmem [resolvable:$true] %s514
          %s516 = sshll.u32 %s512, 4
          %s517 = int_to_ptr.hbm [resolvable:$true] %s516
          %519 = dma.vmem_to_hbm [thread:$0]  %s515, 128, %s517, %s502
        $region56: #{tpu_custom_call.1} parent=31 // pred_fallthru
          _
      $region32: #{tpu_custom_call.1} parent=5 // pred_fallthru
        _
      %p520 = scmp.le.s32.totalorder 2, %s27
      // Predicated region
      $region57: #{tpu_custom_call.1} parent=5 // pred_check
        %p521 = pneg %p520
      $region58: #{tpu_custom_call.1} parent=5 // pred_check_branch
        %523 = sbr.rel (%p521) target = $region60
      $region59: #{tpu_custom_call.1} parent=5 // pred_region
        %s524 = ssub.s32 %s27, 2
        // Predicated region
        $region61: #{tpu_custom_call.1} parent=59 // pred_check
          %p525 = pneg %p150
        $region62: #{tpu_custom_call.1} parent=59 // pred_check_branch
          %527 = sbr.rel (%p525) target = $region64
        $region63: #{tpu_custom_call.1} parent=59 // pred_region
          %s528 = sand.u32 %s135, 1
          %s529 = scalar_lea.sflag [#allocation11], %s528
          %s530 = sand.u32 %s135, 1
          %s531 = smul.addr %s530, 8
          %s532 = scalar_lea.vmem [#allocation15], %s531
          %534 = dma.done %s529, 128
        $region64: #{tpu_custom_call.1} parent=59 // pred_fallthru
          _
      $region60: #{tpu_custom_call.1} parent=5 // pred_fallthru
        _
    $region6: #{tpu_custom_call.1} parent=1 // loop_footer
      %s31 = sadd.s32 1, %s27
    $region7: #{tpu_custom_call.1} parent=1 // loop_footer_branch
      %26 = sbr.rel target = $region3
    $region8: #{tpu_custom_call.1} parent=1 // loop_exit
      _
    %535 = vsyncpa [#allocation10], 1
    %s536 = scalar_lea.sflag [#allocation10], 1
    %537 = vsyncpa %s536, 1
    %538 = vsyncpa [#allocation13], 1
    %s539 = scalar_lea.sflag [#allocation13], 1
    %540 = vsyncpa %s539, 1
    %541 = vsyncpa [#allocation11], 1
    %s542 = scalar_lea.sflag [#allocation11], 1
    %543 = vsyncpa %s542, 1

</llo_original>
